<compile_context>
chip_gen: v7x
topology: tpu7x:2x2x1
jax: 0.10.0
libtpu: 0.0.40
codegen_flags: <defaults>
</compile_context>

<pallas_src>
import functools

import jax
import jax.numpy as jnp
from jax.experimental import pallas as pl
from jax.experimental.pallas import tpu as pltpu


def _round_up(x, m):
    return ((x + m - 1) // m) * m


def _choose_row_tile(n_assets):
    # ~2 MiB per f32 input tile (amortizes ~0.35 us/step grid overhead, keeps
    # 3 inputs x 2 pipeline buffers under every generation's scoped-VMEM
    # default).  Row cap 8192: the [TB,1] per-row intermediates are stored at
    # 1/128 lane density, so bigger tiles stop paying off (see header note).
    target_elems = (2 * 1024 * 1024) // 4
    tb = max(32, min(8192, target_elems // max(n_assets, 1)))
    return _round_up(tb, 32)


def _sharpe_partials_kernel(w_ref, r_ref, m_ref, n_ref, mean_ref, m2_ref, *,
                            true_b, tile_b):
    c = pl.program_id(0)          # split index ("parallel", per-TensorCore on v7x)
    i = pl.program_id(1)          # row-tile index within the split ("arbitrary")

    @pl.when(i == 0)
    def _init():
        n_ref[...] = jnp.zeros_like(n_ref)
        mean_ref[...] = jnp.zeros_like(mean_ref)
        m2_ref[...] = jnp.zeros_like(m2_ref)

    # Cast-on-load: inputs keep their HBM storage dtype (f32/bf16/int8/bool);
    # all math is f32 on the VPU (v5e has no bf16 VALU).
    w = w_ref[...].astype(jnp.float32)
    r = r_ref[...].astype(jnp.float32)
    m_raw = m_ref[...]
    if m_raw.dtype == jnp.bool_:
        m = jnp.where(m_raw, jnp.float32(1.0), jnp.float32(0.0))
    else:
        m = m_raw.astype(jnp.float32)

    # Per-row portfolio return for this tile: [TB, 1] (lane reduction).
    # NOTE: if a v7x bundle read ever shows the XLU as the saturating slot,
    # switch this to an MXU dot with a ones-(N, 1) operand.
    port = jnp.sum(w * m * r, axis=1, keepdims=True)

    t = c * pl.num_programs(1) + i          # global row-tile index
    last_valid = (true_b - 1) // tile_b     # static: last tile with real rows
    rem = true_b - last_valid * tile_b      # static: rows in that tile (1..TB)

    def _accumulate(n_b, mean_b, m2_b):
        # Chan's parallel-variance combine into the running (n, mean, M2),
        # numerically robust for low-variance return streams.
        n_a, mean_a, m2_a = n_ref[...], mean_ref[...], m2_ref[...]
        n_ab = n_a + n_b
        delta = mean_b - mean_a
        n_ref[...] = n_ab
        mean_ref[...] = mean_a + delta * (n_b / n_ab)
        m2_ref[...] = m2_a + m2_b + delta * delta * (n_a * n_b / n_ab)

    def _full_tile():
        n_b = jnp.float32(tile_b)
        mean_b = jnp.sum(port, axis=0, keepdims=True) / n_b
        cen = port - mean_b
        m2_b = jnp.sum(cen * cen, axis=0, keepdims=True)
        _accumulate(n_b, mean_b, m2_b)

    if rem == tile_b:
        # B is a multiple of the tile: every valid tile is full; tiles with
        # t > last_valid (clamped overflow steps) contribute nothing.
        @pl.when(t <= last_valid)
        def _():
            _full_tile()
    else:
        @pl.when(t < last_valid)
        def _():
            _full_tile()

        # Only the single boundary tile pays for the row-masking chain.
        # jnp.where (not multiply) so stale VMEM garbage past the partial DMA
        # (possibly NaN/Inf) cannot leak into the statistics.
        @pl.when(t == last_valid)
        def _ragged():
            row = jax.lax.broadcasted_iota(jnp.int32, (tile_b, 1), 0)
            valid = row < rem
            p = jnp.where(valid, port, jnp.float32(0.0))
            n_b = jnp.float32(rem)
            mean_b = jnp.sum(p, axis=0, keepdims=True) / n_b
            cen = jnp.where(valid, p - mean_b, jnp.float32(0.0))
            m2_b = jnp.sum(cen * cen, axis=0, keepdims=True)
            _accumulate(n_b, mean_b, m2_b)


def sharpe_ratio_loss(pred_weights, actual_returns, mask,
                      risk_free_rate=0.0, annualization_factor=252,
                      row_tile=None, num_splits=None):
    """Negative annualized Sharpe ratio of the masked portfolio (f32 scalar)."""
    assert pred_weights.shape == actual_returns.shape == mask.shape
    assert pred_weights.ndim == 2
    B, N = pred_weights.shape

    # ---- tiling plan (no wrapper padding, no dtype-conversion copies) ----
    tb = int(row_tile) if row_tile is not None else _choose_row_tile(N)
    tb = max(32, _round_up(tb, 32))
    if tb >= B:
        tb, ns, inner = B, 1, 1          # single full-array block (no alignment req.)
    else:
        n_needed = pl.cdiv(B, tb)
        if num_splits is None:
            # v7x: 2 TensorCores per chip -> shard row tiles across them.
            # Harmless (one extra sequential chunk) on 1-TC v5e/v6e.
            ns = 2 if n_needed >= 4 else 1
        else:
            ns = max(1, min(int(num_splits), n_needed))
        inner = pl.cdiv(n_needed, ns)
        # Re-balance the tile over the (ns * inner) grid so the ragged tail
        # is < 32 rows and DMA'd rows are (almost) all real rows.
        tb = _round_up(pl.cdiv(B, ns * inner), 32)

    n_valid_tiles = pl.cdiv(B, tb)           # tiles containing >= 1 real row

    def _row_map(cc, ii):
        t = cc * inner + ii
        # Overflow steps (possible only when ns*inner > n_valid_tiles) re-index
        # the last valid tile; the redundant DMA is skipped by the pipeline and
        # the kernel skips their accumulation.
        return (jnp.minimum(t, n_valid_tiles - 1), 0)

    in_spec = pl.BlockSpec((tb, N), _row_map)
    part_spec = pl.BlockSpec((1, 1, 1), lambda cc, ii: (cc, 0, 0))
    part_shape = jax.ShapeDtypeStruct((ns, 1, 1), jnp.float32)

    kernel = functools.partial(_sharpe_partials_kernel, true_b=B, tile_b=tb)

    n_p, mean_p, m2_p = pl.pallas_call(
        kernel,
        out_shape=(part_shape, part_shape, part_shape),
        grid_spec=pltpu.PrefetchScalarGridSpec(
            num_scalar_prefetch=0,
            grid=(ns, inner),
            in_specs=[in_spec, in_spec, in_spec],
            out_specs=(part_spec, part_spec, part_spec),
        ),
        compiler_params=pltpu.CompilerParams(
            dimension_semantics=("parallel", "arbitrary"),
            vmem_limit_bytes=32 * 1024 * 1024),
    )(pred_weights, actual_returns, mask)

    # ---- final Chan combine over the per-split partials + Sharpe (scalars) ----
    n_p = n_p.reshape(ns)
    mean_p = mean_p.reshape(ns)
    m2_p = m2_p.reshape(ns)
    n_tot, mean_tot, m2_tot = n_p[0], mean_p[0], m2_p[0]
    for s in range(1, ns):
        n_b, mean_b, m2_b = n_p[s], mean_p[s], m2_p[s]
        n_ab = n_tot + n_b
        delta = mean_b - mean_tot
        mean_tot = mean_tot + delta * (n_b / n_ab)
        m2_tot = m2_tot + m2_b + delta * delta * (n_tot * n_b / n_ab)
        n_tot = n_ab

    var = m2_tot / n_tot                            # population var (unbiased=False)
    std = jnp.sqrt(var) + jnp.float32(1e-6)         # eps AFTER sqrt, as in the module
    sharpe = (mean_tot - jnp.float32(risk_free_rate)) / std
    sharpe = sharpe * jnp.sqrt(jnp.float32(annualization_factor))
    return -sharpe


def _reference(pred_weights, actual_returns, mask,
               risk_free_rate=0.0, annualization_factor=252):
    w = pred_weights.astype(jnp.float32)
    r = actual_returns.astype(jnp.float32)
    m = mask.astype(jnp.float32)
    port = jnp.sum(w * m * r, axis=1)
    mean = jnp.mean(port)
    std = jnp.sqrt(jnp.mean((port - mean) ** 2)) + 1e-6
    sharpe = (mean - risk_free_rate) / std * jnp.sqrt(
        jnp.float32(annualization_factor))
    return -sharpe


if __name__ == "__main__":
    # Test 1: small shapes matching a typical call (f32 mask) -> single block.
    k1, k2, k3 = jax.random.split(jax.random.PRNGKey(0), 3)
    B, N = 8, 16
    w = jax.nn.softmax(jax.random.normal(k1, (B, N), jnp.float32), axis=1)
    r = 0.01 * jax.random.normal(k2, (B, N), jnp.float32)
    m = (jax.random.uniform(k3, (B, N)) > 0.2).astype(jnp.float32)

    loss = jax.block_until_ready(sharpe_ratio_loss(w, r, m))
    ref = _reference(w, r, m)
    assert jnp.allclose(loss, ref, rtol=1e-5, atol=1e-6), (loss, ref)

    # Test 2: multi-tile + two-split parallel grid + ragged last tile + bool
    # mask passed straight through (no wrapper pad / astype copies).
    k4, k5, k6 = jax.random.split(jax.random.PRNGKey(1), 3)
    B2, N2 = 300, 128
    w2 = jax.nn.softmax(jax.random.normal(k4, (B2, N2), jnp.float32), axis=1)
    r2 = 0.01 * jax.random.normal(k5, (B2, N2), jnp.float32)
    m2 = jax.random.uniform(k6, (B2, N2)) > 0.2        # bool mask

    loss2 = jax.block_until_ready(sharpe_ratio_loss(w2, r2, m2, row_tile=64))
    ref2 = _reference(w2, r2, m2)
    assert jnp.allclose(loss2, ref2, rtol=1e-4, atol=1e-5), (loss2, ref2)

    print("KERNEL_OK")
</pallas_src>

<mosaic_0001>
module attributes {stable_mosaic.version = 11 : i64} {
  func.func @_sharpe_partials_kernel(%arg0: i32, %arg1: i32, %arg2: memref<8x16xf32, #tpu.memory_space<vmem>>, %arg3: memref<8x16xf32, #tpu.memory_space<vmem>>, %arg4: memref<8x16xf32, #tpu.memory_space<vmem>>, %arg5: memref<1x1x1xf32, #tpu.memory_space<vmem>>, %arg6: memref<1x1x1xf32, #tpu.memory_space<vmem>>, %arg7: memref<1x1x1xf32, #tpu.memory_space<vmem>>) attributes {dimension_semantics = [#tpu.dimension_semantics<parallel>, #tpu.dimension_semantics<arbitrary>], iteration_bounds = array<i64: 1, 1>, scalar_prefetch = 0 : i64, scratch_operands = 0 : i64, tpu.core_type = #tpu.core_type<tc>, window_params = [{transform_indices = @transform_0, window_bounds = array<i64: 8, 16>}, {transform_indices = @transform_1, window_bounds = array<i64: 8, 16>}, {transform_indices = @transform_2, window_bounds = array<i64: 8, 16>}, {transform_indices = @transform_3, window_bounds = array<i64: 1, 1, 1>}, {transform_indices = @transform_4, window_bounds = array<i64: 1, 1, 1>}, {transform_indices = @transform_5, window_bounds = array<i64: 1, 1, 1>}]} {
    %c0_i32 = arith.constant 0 : i32
    %0 = arith.cmpi eq, %arg1, %c0_i32 : i32
    %1 = arith.extui %0 : i1 to i32
    %c0_i32_0 = arith.constant 0 : i32
    %2 = arith.cmpi ne, %1, %c0_i32_0 : i32
    scf.if %2 {
      %cst_8 = arith.constant 0.000000e+00 : f32
      %15 = vector.broadcast %cst_8 : f32 to vector<1x1x1xf32>
      %c0_9 = arith.constant 0 : index
      %c0_10 = arith.constant 0 : index
      %c0_11 = arith.constant 0 : index
      %16 = vector.load %arg5[%c0_9, %c0_10, %c0_11] : memref<1x1x1xf32, #tpu.memory_space<vmem>>, vector<1x1x1xf32>
      tpu.vector_store %arg5[%c0_9, %c0_10, %c0_11], %15 {strides = array<i32>} : memref<1x1x1xf32, #tpu.memory_space<vmem>>, vector<1x1x1xf32>,
      %cst_12 = arith.constant 0.000000e+00 : f32
      %17 = vector.broadcast %cst_12 : f32 to vector<1x1x1xf32>
      %c0_13 = arith.constant 0 : index
      %c0_14 = arith.constant 0 : index
      %c0_15 = arith.constant 0 : index
      %18 = vector.load %arg6[%c0_13, %c0_14, %c0_15] : memref<1x1x1xf32, #tpu.memory_space<vmem>>, vector<1x1x1xf32>
      tpu.vector_store %arg6[%c0_13, %c0_14, %c0_15], %17 {strides = array<i32>} : memref<1x1x1xf32, #tpu.memory_space<vmem>>, vector<1x1x1xf32>,
      %cst_16 = arith.constant 0.000000e+00 : f32
      %19 = vector.broadcast %cst_16 : f32 to vector<1x1x1xf32>
      %c0_17 = arith.constant 0 : index
      %c0_18 = arith.constant 0 : index
      %c0_19 = arith.constant 0 : index
      %20 = vector.load %arg7[%c0_17, %c0_18, %c0_19] : memref<1x1x1xf32, #tpu.memory_space<vmem>>, vector<1x1x1xf32>
      tpu.vector_store %arg7[%c0_17, %c0_18, %c0_19], %19 {strides = array<i32>} : memref<1x1x1xf32, #tpu.memory_space<vmem>>, vector<1x1x1xf32>,
    } else {
    }
    %c0 = arith.constant 0 : index
    %c0_1 = arith.constant 0 : index
    %3 = vector.load %arg2[%c0, %c0_1] : memref<8x16xf32, #tpu.memory_space<vmem>>, vector<8x16xf32>
    %c0_2 = arith.constant 0 : index
    %c0_3 = arith.constant 0 : index
    %4 = vector.load %arg3[%c0_2, %c0_3] : memref<8x16xf32, #tpu.memory_space<vmem>>, vector<8x16xf32>
    %c0_4 = arith.constant 0 : index
    %c0_5 = arith.constant 0 : index
    %5 = vector.load %arg4[%c0_4, %c0_5] : memref<8x16xf32, #tpu.memory_space<vmem>>, vector<8x16xf32>
    %6 = arith.mulf %3, %5 : vector<8x16xf32>
    %7 = arith.mulf %6, %4 : vector<8x16xf32>
    %cst = arith.constant dense<0.000000e+00> : vector<8xf32>
    %8 = vector.multi_reduction <add>, %7, %cst [1] : vector<8x16xf32> to vector<8xf32>
    %9 = vector.shape_cast %8 : vector<8xf32> to vector<8x1xf32>
    %c1_i32 = arith.constant 1 : i32
    %10 = arith.muli %arg0, %c1_i32 : i32
    %11 = arith.addi %10, %arg1 : i32
    %c0_i32_6 = arith.constant 0 : i32
    %12 = arith.cmpi sle, %11, %c0_i32_6 : i32
    %13 = arith.extui %12 : i1 to i32
    %c0_i32_7 = arith.constant 0 : i32
    %14 = arith.cmpi ne, %13, %c0_i32_7 : i32
    scf.if %14 {
      %cst_8 = arith.constant dense<0.000000e+00> : vector<1xf32>
      %15 = vector.multi_reduction <add>, %9, %cst_8 [0] : vector<8x1xf32> to vector<1xf32>
      %16 = vector.shape_cast %15 : vector<1xf32> to vector<1x1xf32>
      %cst_9 = arith.constant 8.000000e+00 : f32
      %17 = vector.broadcast %cst_9 : f32 to vector<1x1xf32>
      %18 = arith.divf %16, %17 : vector<1x1xf32>
      %19 = vector.broadcast %18 : vector<1x1xf32> to vector<8x1xf32>
      %20 = arith.subf %9, %19 : vector<8x1xf32>
      %21 = arith.mulf %20, %20 : vector<8x1xf32>
      %cst_10 = arith.constant dense<0.000000e+00> : vector<1xf32>
      %22 = vector.multi_reduction <add>, %21, %cst_10 [0] : vector<8x1xf32> to vector<1xf32>
      %23 = vector.shape_cast %22 : vector<1xf32> to vector<1x1xf32>
      %c0_11 = arith.constant 0 : index
      %c0_12 = arith.constant 0 : index
      %c0_13 = arith.constant 0 : index
      %24 = vector.load %arg5[%c0_11, %c0_12, %c0_13] : memref<1x1x1xf32, #tpu.memory_space<vmem>>, vector<1x1x1xf32>
      %c0_14 = arith.constant 0 : index
      %c0_15 = arith.constant 0 : index
      %c0_16 = arith.constant 0 : index
      %25 = vector.load %arg6[%c0_14, %c0_15, %c0_16] : memref<1x1x1xf32, #tpu.memory_space<vmem>>, vector<1x1x1xf32>
      %c0_17 = arith.constant 0 : index
      %c0_18 = arith.constant 0 : index
      %c0_19 = arith.constant 0 : index
      %26 = vector.load %arg7[%c0_17, %c0_18, %c0_19] : memref<1x1x1xf32, #tpu.memory_space<vmem>>, vector<1x1x1xf32>
      %cst_20 = arith.constant 8.000000e+00 : f32
      %27 = vector.broadcast %cst_20 : f32 to vector<1x1x1xf32>
      %28 = arith.addf %24, %27 : vector<1x1x1xf32>
      %29 = vector.shape_cast %18 : vector<1x1xf32> to vector<1x1x1xf32>
      %30 = arith.subf %29, %25 : vector<1x1x1xf32>
      %c0_21 = arith.constant 0 : index
      %c0_22 = arith.constant 0 : index
      %c0_23 = arith.constant 0 : index
      %31 = vector.load %arg5[%c0_21, %c0_22, %c0_23] : memref<1x1x1xf32, #tpu.memory_space<vmem>>, vector<1x1x1xf32>
      tpu.vector_store %arg5[%c0_21, %c0_22, %c0_23], %28 {strides = array<i32>} : memref<1x1x1xf32, #tpu.memory_space<vmem>>, vector<1x1x1xf32>,
      %cst_24 = arith.constant 8.000000e+00 : f32
      %32 = vector.broadcast %cst_24 : f32 to vector<1x1x1xf32>
      %33 = arith.divf %32, %28 : vector<1x1x1xf32>
      %34 = arith.mulf %30, %33 : vector<1x1x1xf32>
      %35 = arith.addf %25, %34 : vector<1x1x1xf32>
      %c0_25 = arith.constant 0 : index
      %c0_26 = arith.constant 0 : index
      %c0_27 = arith.constant 0 : index
      %36 = vector.load %arg6[%c0_25, %c0_26, %c0_27] : memref<1x1x1xf32, #tpu.memory_space<vmem>>, vector<1x1x1xf32>
      tpu.vector_store %arg6[%c0_25, %c0_26, %c0_27], %35 {strides = array<i32>} : memref<1x1x1xf32, #tpu.memory_space<vmem>>, vector<1x1x1xf32>,
      %37 = vector.shape_cast %23 : vector<1x1xf32> to vector<1x1x1xf32>
      %38 = arith.addf %26, %37 : vector<1x1x1xf32>
      %39 = arith.mulf %30, %30 : vector<1x1x1xf32>
      %cst_28 = arith.constant 8.000000e+00 : f32
      %40 = vector.broadcast %cst_28 : f32 to vector<1x1x1xf32>
      %41 = arith.mulf %24, %40 : vector<1x1x1xf32>
      %42 = arith.divf %41, %28 : vector<1x1x1xf32>
      %43 = arith.mulf %39, %42 : vector<1x1x1xf32>
      %44 = arith.addf %38, %43 : vector<1x1x1xf32>
      %c0_29 = arith.constant 0 : index
      %c0_30 = arith.constant 0 : index
      %c0_31 = arith.constant 0 : index
      %45 = vector.load %arg7[%c0_29, %c0_30, %c0_31] : memref<1x1x1xf32, #tpu.memory_space<vmem>>, vector<1x1x1xf32>
      tpu.vector_store %arg7[%c0_29, %c0_30, %c0_31], %44 {strides = array<i32>} : memref<1x1x1xf32, #tpu.memory_space<vmem>>, vector<1x1x1xf32>,
    } else {
    }
    return
  }
  func.func @transform_0(%arg0: i32, %arg1: i32) -> (i32, i32) {
    %c1_i32 = arith.constant 1 : i32
    %0 = arith.muli %arg0, %c1_i32 : i32
    %1 = arith.addi %0, %arg1 : i32
    %c0_i32 = arith.constant 0 : i32
    %2 = arith.minsi %1, %c0_i32 : i32
    %c0_i32_0 = arith.constant 0 : i32
    %c0_i32_1 = arith.constant 0 : i32
    return %2, %c0_i32_0 : i32, i32
  }
  func.func @transform_1(%arg0: i32, %arg1: i32) -> (i32, i32) {
    %c1_i32 = arith.constant 1 : i32
    %0 = arith.muli %arg0, %c1_i32 : i32
    %1 = arith.addi %0, %arg1 : i32
    %c0_i32 = arith.constant 0 : i32
    %2 = arith.minsi %1, %c0_i32 : i32
    %c0_i32_0 = arith.constant 0 : i32
    %c0_i32_1 = arith.constant 0 : i32
    return %2, %c0_i32_0 : i32, i32
  }
  func.func @transform_2(%arg0: i32, %arg1: i32) -> (i32, i32) {
    %c1_i32 = arith.constant 1 : i32
    %0 = arith.muli %arg0, %c1_i32 : i32
    %1 = arith.addi %0, %arg1 : i32
    %c0_i32 = arith.constant 0 : i32
    %2 = arith.minsi %1, %c0_i32 : i32
    %c0_i32_0 = arith.constant 0 : i32
    %c0_i32_1 = arith.constant 0 : i32
    return %2, %c0_i32_0 : i32, i32
  }
  func.func @transform_3(%arg0: i32, %arg1: i32) -> (i32, i32, i32) {
    %c0_i32 = arith.constant 0 : i32
    %c0_i32_0 = arith.constant 0 : i32
    %c0_i32_1 = arith.constant 0 : i32
    return %arg0, %c0_i32, %c0_i32_0 : i32, i32, i32
  }
  func.func @transform_4(%arg0: i32, %arg1: i32) -> (i32, i32, i32) {
    %c0_i32 = arith.constant 0 : i32
    %c0_i32_0 = arith.constant 0 : i32
    %c0_i32_1 = arith.constant 0 : i32
    return %arg0, %c0_i32, %c0_i32_0 : i32, i32, i32
  }
  func.func @transform_5(%arg0: i32, %arg1: i32) -> (i32, i32, i32) {
    %c0_i32 = arith.constant 0 : i32
    %c0_i32_0 = arith.constant 0 : i32
    %c0_i32_1 = arith.constant 0 : i32
    return %arg0, %c0_i32, %c0_i32_0 : i32, i32, i32
  }
}

</mosaic_0001>

<llo_original>
// kernel: tpu_custom_call.1
$region0: #{tpu_custom_call.1}
  #allocation0 [shape = 'u32[]', space=smem, size = 0x4, offset = 0x4, fixed_abs, tag = 'smem constant byte address 0x4 - core index']
  #allocation1 [shape = 'u32[144,128]{1,0:T(1,128)}', space=vmem, size = 0x12000, scoped, tag = 'internal scratch']
  %s0 = inlined_call_operand.hbm [shape: f32[8,16], index: 0, kind: input, shape index: {}]
  %s1 = inlined_call_operand.hbm [shape: f32[8,16], index: 1, kind: input, shape index: {}]
  %s2 = inlined_call_operand.hbm [shape: f32[8,16], index: 2, kind: input, shape index: {}]
  %s3 = inlined_call_operand.hbm [shape: f32[1,1,1], index: 3, kind: output, shape index: {0}]
  %s4 = inlined_call_operand.hbm [shape: f32[1,1,1], index: 4, kind: output, shape index: {1}]
  %s5 = inlined_call_operand.hbm [shape: f32[1,1,1], index: 5, kind: output, shape index: {2}]
  %6 = xla_tuple %s3, %s4, %s5
  %s7 = sld [smem:[#allocation0]]
  $region58: #{tpu_custom_call.1} parent=0
    _
  %s9 = ssub.s32 1, %s7
  %s10 = scalar_select 0, %s9, %s7
  $region1: #{tpu_custom_call.1} parent=0
    #allocation2 [shape = 'u8[4096]{0}', space=vmem, size = 0x1000, scoped, tag = 'input window, operand 0, single buffered']
    #allocation3 [shape = 's32[1]{0}', space=sflag, size = 0x4, scoped, tag = 'scoped memory for tpu_custom_call.1']
    #allocation4 [shape = 's32[1]{0}', space=sflag, size = 0x4, scoped, tag = 'scoped memory for tpu_custom_call.1']
    #allocation5 [shape = 'u8[4096]{0}', space=vmem, size = 0x1000, scoped, tag = 'input window, operand 1, single buffered']
    #allocation6 [shape = 's32[1]{0}', space=sflag, size = 0x4, scoped, tag = 'scoped memory for tpu_custom_call.1']
    #allocation7 [shape = 'u8[4096]{0}', space=vmem, size = 0x1000, scoped, tag = 'input window, operand 2, single buffered']
    #allocation8 [shape = 'u8[512]{0}', space=vmem, size = 0x400, scoped, tag = 'output window, operand 0, single buffered']
    #allocation9 [shape = 'u8[512]{0}', space=vmem, size = 0x400, scoped, tag = 'output window, operand 1, single buffered']
    #allocation10 [shape = 's32[1]{0}', space=sflag, size = 0x4, scoped, tag = 'scoped memory for tpu_custom_call.1']
    #allocation11 [shape = 'u8[512]{0}', space=vmem, size = 0x400, scoped, tag = 'output window, operand 2, single buffered']
    %11 = vsyncpa [#allocation3], 0
    %12 = vsyncpa [#allocation6], 0
    %13 = vsyncpa [#allocation4], 0
    %14 = vsyncpa [#allocation10], 0
    // Predicated region
    $region2: #{tpu_custom_call.1} parent=1 // pred_check
      _
    $region3: #{tpu_custom_call.1} parent=1 // pred_check_branch
      %16 = sbr.rel (0) target = $region5
    $region4: #{tpu_custom_call.1} parent=1 // pred_region
      %s17 = sadd.s32 0, 0
      %p18 = scmp.lt.s32.totalorder %s17, 0
      %s19 = scalar_select %p18, %s17, 0
      %s21 = ssub.s32 128, 128
      %22 = vsyncadd [#allocation3], %s21
      %s23 = smul.addr %s19, 128
      %s24 = scalar_lea.hbm %s0, %s23
      %s26 = sshll.u32 [#allocation2], 4
      %s27 = int_to_ptr.vmem [resolvable:$true] %s26
      %29 = dma.hbm_to_vmem [thread:$0]  %s24, 128, %s27, [#allocation3]
    $region5: #{tpu_custom_call.1} parent=1 // pred_fallthru
      _
    // Predicated region
    $region6: #{tpu_custom_call.1} parent=1 // pred_check
      _
    $region7: #{tpu_custom_call.1} parent=1 // pred_check_branch
      %31 = sbr.rel (0) target = $region9
    $region8: #{tpu_custom_call.1} parent=1 // pred_region
      %s32 = sadd.s32 0, 0
      %p33 = scmp.lt.s32.totalorder %s32, 0
      %s34 = scalar_select %p33, %s32, 0
      %s36 = ssub.s32 128, 128
      %37 = vsyncadd [#allocation6], %s36
      %s38 = smul.addr %s34, 128
      %s39 = scalar_lea.hbm %s1, %s38
      %s41 = sshll.u32 [#allocation5], 4
      %s42 = int_to_ptr.vmem [resolvable:$true] %s41
      %44 = dma.hbm_to_vmem [thread:$0]  %s39, 128, %s42, [#allocation6]
    $region9: #{tpu_custom_call.1} parent=1 // pred_fallthru
      _
    // Predicated region
    $region10: #{tpu_custom_call.1} parent=1 // pred_check
      _
    $region11: #{tpu_custom_call.1} parent=1 // pred_check_branch
      %46 = sbr.rel (0) target = $region13
    $region12: #{tpu_custom_call.1} parent=1 // pred_region
      %s47 = sadd.s32 0, 0
      %p48 = scmp.lt.s32.totalorder %s47, 0
      %s49 = scalar_select %p48, %s47, 0
      %s51 = ssub.s32 128, 128
      %52 = vsyncadd [#allocation6], %s51
      %s53 = smul.addr %s49, 128
      %s54 = scalar_lea.hbm %s2, %s53
      %s56 = sshll.u32 [#allocation7], 4
      %s57 = int_to_ptr.vmem [resolvable:$true] %s56
      %59 = dma.hbm_to_vmem [thread:$0]  %s54, 128, %s57, [#allocation6]
    $region13: #{tpu_custom_call.1} parent=1 // pred_fallthru
      _
    // Predicated region
    $region14: #{tpu_custom_call.1} parent=1 // pred_check
      _
    $region15: #{tpu_custom_call.1} parent=1 // pred_check_branch
      %61 = sbr.rel (0) target = $region17
    $region16: #{tpu_custom_call.1} parent=1 // pred_region
      %62 = dma.done [#allocation3], 128
    $region17: #{tpu_custom_call.1} parent=1 // pred_fallthru
      _
    // Predicated region
    $region18: #{tpu_custom_call.1} parent=1 // pred_check
      _
    $region19: #{tpu_custom_call.1} parent=1 // pred_check_branch
      %64 = sbr.rel (0) target = $region21
    $region20: #{tpu_custom_call.1} parent=1 // pred_region
      %65 = dma.done [#allocation6], 128
    $region21: #{tpu_custom_call.1} parent=1 // pred_fallthru
      _
    // Predicated region
    $region22: #{tpu_custom_call.1} parent=1 // pred_check
      _
    $region23: #{tpu_custom_call.1} parent=1 // pred_check_branch
      %67 = sbr.rel (0) target = $region25
    $region24: #{tpu_custom_call.1} parent=1 // pred_region
      %68 = dma.done [#allocation6], 128
    $region25: #{tpu_custom_call.1} parent=1 // pred_fallthru
      _
    %s69 = sadd.s32 0, 0
    %p70 = scmp.lt.s32.totalorder %s69, 0
    %s71 = scalar_select %p70, %s69, 0
    %s72 = sadd.s32 0, 0
    %p73 = scmp.lt.s32.totalorder %s72, 0
    %s74 = scalar_select %p73, %s72, 0
    %s75 = sadd.s32 0, 0
    %p76 = scmp.lt.s32.totalorder %s75, 0
    %s77 = scalar_select %p76, %s75, 0
    %p78 = scmp.eq.s32.totalorder 0, 0
    // Predicated region
    $region26: #{tpu_custom_call.1} parent=1 // pred_check
      %p79 = pneg %p78
    $region27: #{tpu_custom_call.1} parent=1 // pred_check_branch
      %81 = sbr.rel (%p79) target = $region29
    $region28: #{tpu_custom_call.1} parent=1 // pred_region
      %vm82 = vcmask 0
      %83 = vst.msk [vmem:[#allocation8] sm:$0x1] %vm82, 0.0
      %84 = vst.msk [vmem:[#allocation9] sm:$0x1] %vm82, 0.0
      %85 = vst.msk [vmem:[#allocation11] sm:$0x1] %vm82, 0.0
    $region29: #{tpu_custom_call.1} parent=1 // pred_fallthru
      _
    %v86 = vld [vmem:[#allocation2] sm:$0xff]
    %v87 = vld [vmem:[#allocation5] sm:$0xff]
    %v88 = vld [vmem:[#allocation7] sm:$0xff]
    %v89 = vmul.f32 %v86, %v88
    %v90 = vmul.f32 %v89, %v87
    %vm91 = vcmask 130048
    %v92 = vsel %vm91, %v90, 0.0
    %93 = vadd.xlane.f32.xlu0 %v92
    %v94 = vpop.xlane.xlu0 %93
    %s95 = sadd.s32 0, 0
    %p96 = scmp.le.s32.totalorder %s95, 0
    // Predicated region
    $region30: #{tpu_custom_call.1} parent=1 // pred_check
      %p97 = pneg %p96
    $region31: #{tpu_custom_call.1} parent=1 // pred_check_branch
      %99 = sbr.rel (%p97) target = $region33
    $region32: #{tpu_custom_call.1} parent=1 // pred_region
      %v100 = vrot.slane %v94, 4
      %v101 = vadd.f32 %v94, %v100
      %v102 = vrot.slane %v101, 2
      %v103 = vadd.f32 %v101, %v102
      %v104 = vrot.slane %v103, 1
      %v105 = vadd.f32 %v103, %v104
      %v106 = vrcp.pop 8.0
      %v107 = vmul.f32 %v105, %v106
      %v108 = vsub.f32 %v94, %v107
      %v109 = vmul.f32 %v108, %v108
      %v110 = vrot.slane %v109, 4
      %v111 = vadd.f32 %v109, %v110
      %v112 = vrot.slane %v111, 2
      %v113 = vadd.f32 %v111, %v112
      %v114 = vrot.slane %v113, 1
      %v115 = vadd.f32 %v113, %v114
      %v116 = vld [vmem:[#allocation8] sm:$0x1]
      %v117 = vld [vmem:[#allocation9] sm:$0x1]
      %v118 = vld [vmem:[#allocation11] sm:$0x1]
      %v119 = vadd.f32 %v116, 8.0
      %v120 = vsub.f32 %v107, %v117
      %vm121 = vcmask 0
      %122 = vst.msk [vmem:[#allocation8] sm:$0x1] %vm121, %v119
      %v123 = vrcp.pop %v119
      %v124 = vmul.f32 8.0, %v123
      %v125 = vmul.f32 %v120, %v124
      %v126 = vadd.f32 %v117, %v125
      %127 = vst.msk [vmem:[#allocation9] sm:$0x1] %vm121, %v126
      %v128 = vadd.f32 %v118, %v115
      %v129 = vmul.f32 %v120, %v120
      %v130 = vmul.f32 %v116, 8.0
      %v131 = vmul.f32 %v130, %v123
      %v132 = vmul.f32 %v129, %v131
      %v133 = vadd.f32 %v128, %v132
      %134 = vst.msk [vmem:[#allocation11] sm:$0x1] %vm121, %v133
    $region33: #{tpu_custom_call.1} parent=1 // pred_fallthru
      _
    // Predicated region
    $region34: #{tpu_custom_call.1} parent=1 // pred_check
      _
    $region35: #{tpu_custom_call.1} parent=1 // pred_check_branch
      %136 = sbr.rel (0) target = $region37
    $region36: #{tpu_custom_call.1} parent=1 // pred_region
      %s138 = ssub.s32 16, 16
      %139 = vsyncadd [#allocation4], %s138
      %s141 = sshll.u32 [#allocation8], 4
      %s142 = int_to_ptr.vmem [resolvable:$true] %s141
      %144 = dma.vmem_to_hbm [thread:$0]  %s142, 16, %s3, [#allocation4]
    $region37: #{tpu_custom_call.1} parent=1 // pred_fallthru
      _
    // Predicated region
    $region38: #{tpu_custom_call.1} parent=1 // pred_check
      _
    $region39: #{tpu_custom_call.1} parent=1 // pred_check_branch
      %146 = sbr.rel (0) target = $region41
    $region40: #{tpu_custom_call.1} parent=1 // pred_region
      %s148 = ssub.s32 16, 16
      %149 = vsyncadd [#allocation10], %s148
      %s151 = sshll.u32 [#allocation9], 4
      %s152 = int_to_ptr.vmem [resolvable:$true] %s151
      %154 = dma.vmem_to_hbm [thread:$0]  %s152, 16, %s4, [#allocation10]
    $region41: #{tpu_custom_call.1} parent=1 // pred_fallthru
      _
    // Predicated region
    $region42: #{tpu_custom_call.1} parent=1 // pred_check
      _
    $region43: #{tpu_custom_call.1} parent=1 // pred_check_branch
      %156 = sbr.rel (0) target = $region45
    $region44: #{tpu_custom_call.1} parent=1 // pred_region
      %s158 = ssub.s32 16, 16
      %159 = vsyncadd [#allocation10], %s158
      %s161 = sshll.u32 [#allocation11], 4
      %s162 = int_to_ptr.vmem [resolvable:$true] %s161
      %164 = dma.vmem_to_hbm [thread:$0]  %s162, 16, %s5, [#allocation10]
    $region45: #{tpu_custom_call.1} parent=1 // pred_fallthru
      _
    // Predicated region
    $region46: #{tpu_custom_call.1} parent=1 // pred_check
      _
    $region47: #{tpu_custom_call.1} parent=1 // pred_check_branch
      %166 = sbr.rel (0) target = $region49
    $region48: #{tpu_custom_call.1} parent=1 // pred_region
      %167 = dma.done [#allocation4], 16
    $region49: #{tpu_custom_call.1} parent=1 // pred_fallthru
      _
    // Predicated region
    $region50: #{tpu_custom_call.1} parent=1 // pred_check
      _
    $region51: #{tpu_custom_call.1} parent=1 // pred_check_branch
      %169 = sbr.rel (0) target = $region53
    $region52: #{tpu_custom_call.1} parent=1 // pred_region
      %170 = dma.done [#allocation10], 16
    $region53: #{tpu_custom_call.1} parent=1 // pred_fallthru
      _
    // Predicated region
    $region54: #{tpu_custom_call.1} parent=1 // pred_check
      _
    $region55: #{tpu_custom_call.1} parent=1 // pred_check_branch
      %172 = sbr.rel (0) target = $region57
    $region56: #{tpu_custom_call.1} parent=1 // pred_region
      %173 = dma.done [#allocation10], 16
    $region57: #{tpu_custom_call.1} parent=1 // pred_fallthru
      _
    %174 = vsyncpa [#allocation3], 1
    %175 = vsyncpa [#allocation6], 1
    %176 = vsyncpa [#allocation4], 1
    %177 = vsyncpa [#allocation10], 1

</llo_original>
